<compile_context>
chip_gen: v5e
topology: v5e:2x2
jax: 0.10.0
libtpu: 0.0.40
codegen_flags: <defaults>
</compile_context>

<pallas_src>
import functools

import jax
import jax.numpy as jnp
from jax.experimental import pallas as pl
from jax.experimental.pallas import tpu as pltpu


_LANE = 128
_PACK_ROWS = 16   # 3 (target_transl) + 3 (transl_err) + 4 (target_rot) + 4 (rot_err) = 14, pad to 16


def _proposed_loss_kernel(x_ref, out_ref, *, c_trans, c_rot, n, n_pad):
    # x: (16, n_pad) f32, lane-dense over the batch dimension.
    #   rows 0:3   target_transl.T
    #   rows 3:6   transl_err.T
    #   rows 6:10  target_rot.T      (w, x, y, z)
    #   rows 10:14 rot_err.T         (w, x, y, z)
    x = x_ref[...]

    # Mask out zero-padded batch lanes (cheap VPU compare/select).
    lane = jax.lax.broadcasted_iota(jnp.int32, (1, n_pad), 1)
    valid = (lane < n).astype(jnp.float32)                          # (1, n_pad)

    contrib = jnp.zeros((1, n_pad), jnp.float32)

    if c_trans != 0.0:
        # SmoothL1Loss(reduction='none'), beta=1.0
        d = x[3:6, :] - x[0:3, :]                                   # (3, n_pad)
        ad = jnp.abs(d)
        sl1 = jnp.where(ad < 1.0, 0.5 * d * d, ad - 0.5)            # (3, n_pad)
        # .sum(1) per sample == sum over the 3 sublane rows (plain VPU adds).
        row = sl1[0:1, :] + sl1[1:2, :] + sl1[2:3, :]               # (1, n_pad)
        contrib = contrib + jnp.float32(c_trans) * row              # c_trans = rescale_trans / n

    if c_rot != 0.0:
        # quatinv(target_rot) == conjugate (inverse for unit quats; atan2 is
        # scale-invariant so the angle is also correct for non-unit quats).
        rw, rx, ry, rz = x[6:7, :], -x[7:8, :], -x[8:9, :], -x[9:10, :]
        qw, qx, qy, qz = x[10:11, :], x[11:12, :], x[12:13, :], x[13:14, :]
        # t = quatmultiply(rot_err, quatinv(target_rot)).  NOTE: the vector-part
        # norm and |w| are symmetric in the Hamilton product order, so the
        # resulting atan2 distance is identical either way — do not "fix" signs.
        tw = rw * qw - rx * qx - ry * qy - rz * qz
        tx = rw * qx + rx * qw - ry * qz + rz * qy
        ty = rw * qy + rx * qz + ry * qw - rz * qx
        tz = rw * qz - rx * qy + ry * qx + rz * qw
        vec_norm = jnp.sqrt(tx * tx + ty * ty + tz * tz)            # (1, n_pad)
        dist = 2.0 * jnp.arctan2(vec_norm, jnp.abs(tw))             # (1, n_pad)
        contrib = contrib + jnp.float32(c_rot) * dist               # c_rot = rescale_rot / n

    # Single fused cross-lane reduce for both loss terms.
    out_ref[...] = jnp.sum(contrib * valid, axis=1, keepdims=True)  # (1, 1)


def proposed_loss(target_transl, target_rot, transl_err, rot_err,
                  rescale_trans=1.0, rescale_rot=1.0):
    n = target_transl.shape[0]
    n_pad = max(_LANE, ((n + _LANE - 1) // _LANE) * _LANE)

    def prep(a):
        # transpose to (F, N) lane-dense layout, cast once, zero-pad the lanes
        a = a.astype(jnp.float32).T
        return jnp.pad(a, ((0, 0), (0, n_pad - n)))

    # Pack all four tiny inputs into one slab -> a single input DMA.
    packed = jnp.concatenate(
        [prep(target_transl), prep(transl_err), prep(target_rot), prep(rot_err),
         jnp.zeros((_PACK_ROWS - 14, n_pad), jnp.float32)],
        axis=0)                                                     # (16, n_pad)

    kernel = functools.partial(
        _proposed_loss_kernel,
        c_trans=float(rescale_trans) / n,   # fold rescale and 1/n at trace time
        c_rot=float(rescale_rot) / n,
        n=n,
        n_pad=n_pad,
    )

    # TODO(synk): for very large N (per-point losses, N >= ~1e5) add a 1-D grid
    # over lane tiles with a pl.when-guarded accumulator; batch-loss N is small
    # so a single full-array block is the cheapest path here.
    vmem = pl.BlockSpec(memory_space=pltpu.MemorySpace.VMEM)
    out = pl.pallas_call(
        kernel,
        out_shape=jax.ShapeDtypeStruct((1, 1), jnp.float32),
        in_specs=[vmem],
        out_specs=vmem,
    )(packed)
    return out[0, 0]


# ---------------- pure-JAX reference (mirrors the PyTorch module) ------------
def _reference(target_transl, target_rot, transl_err, rot_err,
               rescale_trans, rescale_rot):
    total = jnp.float32(0.0)
    if rescale_trans != 0.0:
        d = transl_err - target_transl
        ad = jnp.abs(d)
        sl1 = jnp.where(ad < 1.0, 0.5 * d * d, ad - 0.5)
        total = total + rescale_trans * jnp.mean(jnp.sum(sl1, axis=1))
    if rescale_rot != 0.0:
        q, r = rot_err, target_rot
        rw, rx, ry, rz = r[:, 0], -r[:, 1], -r[:, 2], -r[:, 3]
        qw, qx, qy, qz = q[:, 0], q[:, 1], q[:, 2], q[:, 3]
        tw = rw * qw - rx * qx - ry * qy - rz * qz
        tx = rw * qx + rx * qw - ry * qz + rz * qy
        ty = rw * qy + rx * qz + ry * qw - rz * qx
        tz = rw * qz - rx * qy + ry * qx + rz * qw
        dist = 2.0 * jnp.arctan2(jnp.sqrt(tx * tx + ty * ty + tz * tz), jnp.abs(tw))
        total = total + rescale_rot * jnp.mean(dist)
    return total


if __name__ == "__main__":
    key = jax.random.PRNGKey(0)
    k1, k2, k3, k4 = jax.random.split(key, 4)
    N = 8  # batch

    target_transl = jax.random.normal(k1, (N, 3), jnp.float32)
    transl_err = jax.random.normal(k2, (N, 3), jnp.float32)
    tr = jax.random.normal(k3, (N, 4), jnp.float32)
    target_rot = tr / jnp.linalg.norm(tr, axis=1, keepdims=True)
    re = jax.random.normal(k4, (N, 4), jnp.float32)
    rot_err = re / jnp.linalg.norm(re, axis=1, keepdims=True)

    rescale_trans, rescale_rot = 1.0, 1.0  # ProposedLoss(rescale_trans, rescale_rot)

    loss = proposed_loss(target_transl, target_rot, transl_err, rot_err,
                         rescale_trans, rescale_rot)
    loss = jax.block_until_ready(loss)

    ref = _reference(target_transl, target_rot, transl_err, rot_err,
                     rescale_trans, rescale_rot)
    assert jnp.allclose(loss, ref, atol=1e-5, rtol=1e-5), (loss, ref)
    print("KERNEL_OK")
</pallas_src>

<mosaic_0001>
module attributes {stable_mosaic.version = 11 : i64} {
  func.func @_proposed_loss_kernel(%arg0: memref<16x128xf32, #tpu.memory_space<vmem>>, %arg1: memref<1x1xf32, #tpu.memory_space<vmem>>) attributes {dimension_semantics = [], scalar_prefetch = 0 : i64, scratch_operands = 0 : i64, tpu.core_type = #tpu.core_type<tc>} {
    %c0 = arith.constant 0 : index
    %c0_0 = arith.constant 0 : index
    %0 = vector.load %arg0[%c0, %c0_0] : memref<16x128xf32, #tpu.memory_space<vmem>>, vector<16x128xf32>
    %1 = tpu.iota {dimensions = array<i32: 1>} : vector<1x128xi32>
    %c8_i32 = arith.constant 8 : i32
    %2 = vector.broadcast %c8_i32 : i32 to vector<1x128xi32>
    %3 = arith.cmpi slt, %1, %2 : vector<1x128xi32>
    %4 = arith.extui %3 : vector<1x128xi1> to vector<1x128xi32>
    %5 = arith.sitofp %4 : vector<1x128xi32> to vector<1x128xf32>
    %cst = arith.constant 0.000000e+00 : f32
    %6 = vector.broadcast %cst : f32 to vector<1x128xf32>
    %7 = vector.extract_strided_slice %0 {offsets = [3, 0], sizes = [3, 128], strides = [1, 1]} : vector<16x128xf32> to vector<3x128xf32>
    %8 = vector.extract_strided_slice %0 {offsets = [0, 0], sizes = [3, 128], strides = [1, 1]} : vector<16x128xf32> to vector<3x128xf32>
    %9 = arith.subf %7, %8 : vector<3x128xf32>
    %10 = math.absf %9 : vector<3x128xf32>
    %cst_1 = arith.constant 1.000000e+00 : f32
    %11 = vector.broadcast %cst_1 : f32 to vector<3x128xf32>
    %12 = arith.cmpf olt, %10, %11 : vector<3x128xf32>
    %cst_2 = arith.constant 5.000000e-01 : f32
    %13 = vector.broadcast %cst_2 : f32 to vector<3x128xf32>
    %14 = arith.mulf %13, %9 : vector<3x128xf32>
    %15 = arith.mulf %14, %9 : vector<3x128xf32>
    %cst_3 = arith.constant 5.000000e-01 : f32
    %16 = vector.broadcast %cst_3 : f32 to vector<3x128xf32>
    %17 = arith.subf %10, %16 : vector<3x128xf32>
    %18 = arith.select %12, %15, %17 : vector<3x128xi1>, vector<3x128xf32>
    %19 = vector.extract_strided_slice %18 {offsets = [0, 0], sizes = [1, 128], strides = [1, 1]} : vector<3x128xf32> to vector<1x128xf32>
    %20 = vector.extract_strided_slice %18 {offsets = [1, 0], sizes = [1, 128], strides = [1, 1]} : vector<3x128xf32> to vector<1x128xf32>
    %21 = arith.addf %19, %20 : vector<1x128xf32>
    %22 = vector.extract_strided_slice %18 {offsets = [2, 0], sizes = [1, 128], strides = [1, 1]} : vector<3x128xf32> to vector<1x128xf32>
    %23 = arith.addf %21, %22 : vector<1x128xf32>
    %cst_4 = arith.constant 1.250000e-01 : f32
    %24 = vector.broadcast %cst_4 : f32 to vector<1x128xf32>
    %25 = arith.mulf %24, %23 : vector<1x128xf32>
    %26 = arith.addf %6, %25 : vector<1x128xf32>
    %27 = vector.extract_strided_slice %0 {offsets = [6, 0], sizes = [1, 128], strides = [1, 1]} : vector<16x128xf32> to vector<1x128xf32>
    %28 = vector.extract_strided_slice %0 {offsets = [7, 0], sizes = [1, 128], strides = [1, 1]} : vector<16x128xf32> to vector<1x128xf32>
    %cst_5 = arith.constant 0.000000e+00 : f32
    %29 = vector.broadcast %cst_5 : f32 to vector<1x128xf32>
    %30 = arith.subf %29, %28 : vector<1x128xf32>
    %31 = vector.extract_strided_slice %0 {offsets = [8, 0], sizes = [1, 128], strides = [1, 1]} : vector<16x128xf32> to vector<1x128xf32>
    %cst_6 = arith.constant 0.000000e+00 : f32
    %32 = vector.broadcast %cst_6 : f32 to vector<1x128xf32>
    %33 = arith.subf %32, %31 : vector<1x128xf32>
    %34 = vector.extract_strided_slice %0 {offsets = [9, 0], sizes = [1, 128], strides = [1, 1]} : vector<16x128xf32> to vector<1x128xf32>
    %cst_7 = arith.constant 0.000000e+00 : f32
    %35 = vector.broadcast %cst_7 : f32 to vector<1x128xf32>
    %36 = arith.subf %35, %34 : vector<1x128xf32>
    %37 = vector.extract_strided_slice %0 {offsets = [10, 0], sizes = [1, 128], strides = [1, 1]} : vector<16x128xf32> to vector<1x128xf32>
    %38 = vector.extract_strided_slice %0 {offsets = [11, 0], sizes = [1, 128], strides = [1, 1]} : vector<16x128xf32> to vector<1x128xf32>
    %39 = vector.extract_strided_slice %0 {offsets = [12, 0], sizes = [1, 128], strides = [1, 1]} : vector<16x128xf32> to vector<1x128xf32>
    %40 = vector.extract_strided_slice %0 {offsets = [13, 0], sizes = [1, 128], strides = [1, 1]} : vector<16x128xf32> to vector<1x128xf32>
    %41 = arith.mulf %27, %37 : vector<1x128xf32>
    %42 = arith.mulf %30, %38 : vector<1x128xf32>
    %43 = arith.subf %41, %42 : vector<1x128xf32>
    %44 = arith.mulf %33, %39 : vector<1x128xf32>
    %45 = arith.subf %43, %44 : vector<1x128xf32>
    %46 = arith.mulf %36, %40 : vector<1x128xf32>
    %47 = arith.subf %45, %46 : vector<1x128xf32>
    %48 = arith.mulf %27, %38 : vector<1x128xf32>
    %49 = arith.mulf %30, %37 : vector<1x128xf32>
    %50 = arith.addf %48, %49 : vector<1x128xf32>
    %51 = arith.mulf %33, %40 : vector<1x128xf32>
    %52 = arith.subf %50, %51 : vector<1x128xf32>
    %53 = arith.mulf %36, %39 : vector<1x128xf32>
    %54 = arith.addf %52, %53 : vector<1x128xf32>
    %55 = arith.mulf %27, %39 : vector<1x128xf32>
    %56 = arith.mulf %30, %40 : vector<1x128xf32>
    %57 = arith.addf %55, %56 : vector<1x128xf32>
    %58 = arith.mulf %33, %37 : vector<1x128xf32>
    %59 = arith.addf %57, %58 : vector<1x128xf32>
    %60 = arith.mulf %36, %38 : vector<1x128xf32>
    %61 = arith.subf %59, %60 : vector<1x128xf32>
    %62 = arith.mulf %27, %40 : vector<1x128xf32>
    %63 = arith.mulf %30, %39 : vector<1x128xf32>
    %64 = arith.subf %62, %63 : vector<1x128xf32>
    %65 = arith.mulf %33, %38 : vector<1x128xf32>
    %66 = arith.addf %64, %65 : vector<1x128xf32>
    %67 = arith.mulf %36, %37 : vector<1x128xf32>
    %68 = arith.addf %66, %67 : vector<1x128xf32>
    %69 = arith.mulf %54, %54 : vector<1x128xf32>
    %70 = arith.mulf %61, %61 : vector<1x128xf32>
    %71 = arith.addf %69, %70 : vector<1x128xf32>
    %72 = arith.mulf %68, %68 : vector<1x128xf32>
    %73 = arith.addf %71, %72 : vector<1x128xf32>
    %74 = math.sqrt %73 : vector<1x128xf32>
    %75 = math.absf %47 : vector<1x128xf32>
    %76 = math.atan2 %74, %75 : vector<1x128xf32>
    %cst_8 = arith.constant 2.000000e+00 : f32
    %77 = vector.broadcast %cst_8 : f32 to vector<1x128xf32>
    %78 = arith.mulf %77, %76 : vector<1x128xf32>
    %cst_9 = arith.constant 1.250000e-01 : f32
    %79 = vector.broadcast %cst_9 : f32 to vector<1x128xf32>
    %80 = arith.mulf %79, %78 : vector<1x128xf32>
    %81 = arith.addf %26, %80 : vector<1x128xf32>
    %82 = arith.mulf %81, %5 : vector<1x128xf32>
    %cst_10 = arith.constant dense<0.000000e+00> : vector<1xf32>
    %83 = vector.multi_reduction <add>, %82, %cst_10 [1] : vector<1x128xf32> to vector<1xf32>
    %84 = vector.shape_cast %83 : vector<1xf32> to vector<1x1xf32>
    %c0_11 = arith.constant 0 : index
    %c0_12 = arith.constant 0 : index
    %85 = vector.load %arg1[%c0_11, %c0_12] : memref<1x1xf32, #tpu.memory_space<vmem>>, vector<1x1xf32>
    tpu.vector_store %arg1[%c0_11, %c0_12], %84 {strides = array<i32>} : memref<1x1xf32, #tpu.memory_space<vmem>>, vector<1x1xf32>,
    return
  }
}

</mosaic_0001>

<llo_original>
// kernel: tpu_custom_call.1
$region0: #{tpu_custom_call.1}
  #allocation0 [shape = 'u32[]', space=smem, size = 0x4, offset = 0x4, fixed_abs, tag = 'smem constant byte address 0x4 - core index']
  #allocation1 [shape = 'u32[72,128]{1,0:T(1,128)}', space=vmem, size = 0x9000, scoped, tag = 'internal scratch']
  %s0 = inlined_call_operand.hbm [shape: f32[16,128], index: 0, kind: input, shape index: {}]
  %s1 = inlined_call_operand.hbm [shape: f32[1,1], index: 1, kind: output, shape index: {}]
  %s2 = sld [smem:[#allocation0]]
  $region18: #{tpu_custom_call.1} parent=0
    _
  %s4 = ssub.s32 1, %s2
  %s5 = scalar_select 0, %s4, %s2
  $region1: #{tpu_custom_call.1} parent=0
    #allocation2 [shape = 'u8[8192]{0}', space=vmem, size = 0x2000, scoped, tag = 'input window, operand 0, single buffered']
    #allocation3 [shape = 's32[1]{0}', space=sflag, size = 0x4, scoped, tag = 'scoped memory for tpu_custom_call.1']
    #allocation4 [shape = 's32[1]{0}', space=sflag, size = 0x4, scoped, tag = 'scoped memory for tpu_custom_call.1']
    #allocation5 [shape = 'u8[512]{0}', space=vmem, size = 0x400, scoped, tag = 'output window, operand 0, single buffered']
    %6 = vsyncpa [#allocation3], 0
    %7 = vsyncpa [#allocation4], 0
    // Predicated region
    $region2: #{tpu_custom_call.1} parent=1 // pred_check
      _
    $region3: #{tpu_custom_call.1} parent=1 // pred_check_branch
      %9 = sbr.rel (0) target = $region5
    $region4: #{tpu_custom_call.1} parent=1 // pred_region
      %11 = vsyncadd [#allocation3], 0
      %s12 = sshll.u32 %s0, 4
      %s13 = int_to_ptr.hbm [resolvable:$true] %s12
      %s14 = sshll.u32 [#allocation2], 4
      %s15 = int_to_ptr.vmem [resolvable:$true] %s14
      %20 = dma.hbm_to_vmem [thread:$0]  %s13, 256, %s15, [#allocation3], 128, 128, 8
    $region5: #{tpu_custom_call.1} parent=1 // pred_fallthru
      _
    // Predicated region
    $region6: #{tpu_custom_call.1} parent=1 // pred_check
      _
    $region7: #{tpu_custom_call.1} parent=1 // pred_check_branch
      %22 = sbr.rel (0) target = $region9
    $region8: #{tpu_custom_call.1} parent=1 // pred_region
      %24 = dma.done [#allocation3], 256
    $region9: #{tpu_custom_call.1} parent=1 // pred_fallthru
      _
    %v25 = vld [vmem:[#allocation2] sm:$0xff]
    %v26 = vld [vmem:[#allocation2 + $0x8] sm:$0xff]
    %v27 = vlaneseq
    %v28 = vand.u32 %v27, 127
    %vm29 = vcmp.lt.s32.totalorder %v28, 8
    %v30 = vsel %vm29, 1, 0
    %v31 = vcvt.s32.f32 %v30
    %v33 = vrot.slane %v25, 5
    %v35 = vsub.f32 %v25, %v33
    %v36 = vand.u32 2147483647, %v35
    %vm37 = vcmp.lt.f32.partialorder %v36, 1.0
    %v38 = vmul.f32 %v35, 0.5
    %v39 = vmul.f32 %v38, %v35
    %v40 = vsub.f32 %v36, 0.5
    %v41 = vsel %vm37, %v39, %v40
    %v43 = vrot.slane %v41, 1
    %v45 = vadd.f32 %v41, %v43
    %v46 = vrot.slane %v41, 2
    %v48 = vadd.f32 %v45, %v46
    %v49 = vmul.f32 %v48, 0.125
    %v50 = vadd.f32 %v49, 0.0
    %v51 = vsub.f32 0.0, %v25
    %v52 = vsub.f32 0.0, %v26
    %v54 = vrot.slane %v26, 4
    %v56 = vmul.f32 %v25, %v54
    %v57 = vmul.f32 %v51, %v54
    %v59 = vrot.slane %v57, 1
    %v61 = vsub.f32 %v56, %v59
    %v62 = vmul.f32 %v52, %v54
    %v64 = vrot.slane %v62, 2
    %v66 = vsub.f32 %v61, %v64
    %v67 = vrot.slane %v62, 3
    %v69 = vsub.f32 %v66, %v67
    %v70 = vrot.slane %v26, 5
    %v72 = vmul.f32 %v25, %v70
    %v73 = vrot.slane %v26, 3
    %v75 = vmul.f32 %v51, %v73
    %v77 = vrot.slane %v75, 1
    %v79 = vadd.f32 %v72, %v77
    %v80 = vmul.f32 %v52, %v70
    %v82 = vrot.slane %v80, 2
    %v84 = vsub.f32 %v79, %v82
    %v85 = vmul.f32 %v52, %v73
    %v87 = vrot.slane %v85, 3
    %v89 = vadd.f32 %v84, %v87
    %v90 = vrot.slane %v26, 6
    %v92 = vmul.f32 %v25, %v90
    %v93 = vmul.f32 %v51, %v90
    %v95 = vrot.slane %v93, 1
    %v97 = vadd.f32 %v92, %v95
    %v98 = vrot.slane %v26, 2
    %v100 = vmul.f32 %v52, %v98
    %v102 = vrot.slane %v100, 2
    %v104 = vadd.f32 %v97, %v102
    %v105 = vrot.slane %v100, 3
    %v107 = vsub.f32 %v104, %v105
    %v108 = vrot.slane %v26, 7
    %v110 = vmul.f32 %v25, %v108
    %v111 = vmul.f32 %v51, %v70
    %v113 = vrot.slane %v111, 1
    %v115 = vsub.f32 %v110, %v113
    %v116 = vrot.slane %v85, 2
    %v118 = vadd.f32 %v115, %v116
    %v119 = vrot.slane %v26, 1
    %v121 = vmul.f32 %v52, %v119
    %v123 = vrot.slane %v121, 3
    %v125 = vadd.f32 %v118, %v123
    %v126 = vmul.f32 %v89, %v89
    %v127 = vmul.f32 %v107, %v107
    %v128 = vadd.f32 %v126, %v127
    %v129 = vmul.f32 %v125, %v125
    %v130 = vadd.f32 %v128, %v129
    %v131 = vrsqrt.pop %v130
    %v132 = vmul.f32 %v131, %v130
    %v133 = vmul.f32 %v132, %v131
    %v134 = vmul.f32 0.5, %v133
    %v135 = vsub.f32 1.5, %v134
    %v136 = vmul.f32 %v131, %v135
    %v137 = vmul.f32 %v130, %v136
    %vm138 = vcmp.eq.f32.partialorder %v130, inf
    %v139 = vsel %vm138, %v130, %v137
    %vm140 = vcmp.eq.f32.partialorder %v130, 0.0
    %v141 = vand.u32 %v130, 2147483648
    %v142 = vsel %vm140, %v141, %v139
    %v143 = vand.u32 2147483647, %v69
    %v144 = vand.u32 2147483647, %v143
    %v145 = vand.u32 2147483647, %v142
    %v146 = vmin.f32 %v144, %v145
    %v147 = vmax.f32 %v144, %v145
    %v148 = vrcp.pop %v147
    %v149 = vmul.f32 %v147, %v148
    %v150 = vsub.f32 1.0, %v149
    %v151 = vmul.f32 %v148, %v150
    %v152 = vadd.f32 %v148, %v151
    %vm153 = vweird.f32 %v147
    %vm154 = vweird.f32 %v148
    %vm155 = vmor %vm153, %vm154
    %v156 = vsel %vm155, %v148, %v152
    %v157 = vand.u32 2147483647, %v147
    %vm158 = vcmp.eq.f32.partialorder %v157, 8.507059e+37
    %v159 = vand.u32 %v147, 2147483648
    %v160 = vor.u32 1.1754944e-38, %v159
    %v161 = vsel %vm158, %v160, %v156
    %v162 = vmul.f32 %v146, %v161
    %v163 = vmul.f32 %v162, %v162
    %v164 = vmul.f32 0.002785687, %v163
    %v165 = vadd.f32 %v164, -0.015866
    %v166 = vmul.f32 %v165, %v163
    %v167 = vadd.f32 %v166, 0.04247222
    %v168 = vmul.f32 %v167, %v163
    %v169 = vadd.f32 %v168, -0.074975304
    %v170 = vmul.f32 %v169, %v163
    %v171 = vadd.f32 %v170, 0.1064488
    %v172 = vmul.f32 %v171, %v163
    %v173 = vadd.f32 %v172, -0.14207031
    %v174 = vmul.f32 %v173, %v163
    %v175 = vadd.f32 %v174, 0.19993454
    %v176 = vmul.f32 %v175, %v163
    %v177 = vadd.f32 %v176, -0.33333147
    %v178 = vmul.f32 %v177, %v163
    %v179 = vmul.f32 %v178, %v162
    %v180 = vadd.f32 %v179, %v162
    %vm181 = vcmp.gt.f32.partialorder %v145, %v144
    %v182 = vsub.f32 1.5707964, %v180
    %v183 = vsel %vm181, %v182, %v180
    %vm184 = vcmp.lt.f32.partialorder %v143, 0.0
    %v185 = vsub.f32 3.1415927, %v183
    %v186 = vsel %vm184, %v185, %v183
    %vm187 = vcmp.eq.f32.partialorder %v142, 0.0
    %v188 = vsel %vm187, 0.0, %v186
    %vm189 = vcmp.ne.f32.partialorder %v143, %v143
    %vm190 = vcmp.ne.f32.partialorder %v142, %v142
    %vm191 = vmor %vm189, %vm190
    %v192 = vsel %vm191, nan, %v188
    %vm193 = vcmp.lt.f32.partialorder %v143, 0.0
    %v194 = vsel %vm193, 2.3561945, 0.7853982
    %vm195 = vcmp.eq.s32.totalorder %v144, inf
    %vm196 = vcmp.eq.s32.totalorder %v145, inf
    %vm197 = vmand %vm195, %vm196
    %v198 = vsel %vm197, %v194, %v192
    %v199 = vand.u32 2147483647, %v198
    %v200 = vand.u32 %v142, 2147483648
    %v201 = vor.u32 %v199, %v200
    %v202 = vmul.f32 %v201, 2.0
    %v203 = vmul.f32 %v202, 0.125
    %v205 = vrot.slane %v203, 3
    %v207 = vadd.f32 %v50, %v205
    %v208 = vmul.f32 %v207, %v31
    %vm209 = vcmask 1043459
    %v210 = vsel %vm209, %v208, 0.0
    %211 = vadd.xlane.f32.xlu0 %v210
    %v212 = vpop.xlane.xlu0 %211
    %vm213 = vcmask 3075
    %214 = vst.msk [vmem:[#allocation5 - $0x3] sm:$0x8] %vm213, %v212
    // Predicated region
    $region10: #{tpu_custom_call.1} parent=1 // pred_check
      _
    $region11: #{tpu_custom_call.1} parent=1 // pred_check_branch
      %216 = sbr.rel (0) target = $region13
    $region12: #{tpu_custom_call.1} parent=1 // pred_region
      %218 = vsyncadd [#allocation4], 0
      %s220 = sshll.u32 [#allocation5], 4
      %s221 = int_to_ptr.vmem [resolvable:$true] %s220
      %s222 = sshll.u32 %s1, 4
      %s223 = int_to_ptr.hbm [resolvable:$true] %s222
      %225 = dma.vmem_to_hbm [thread:$0]  %s221, 16, %s223, [#allocation4]
    $region13: #{tpu_custom_call.1} parent=1 // pred_fallthru
      _
    // Predicated region
    $region14: #{tpu_custom_call.1} parent=1 // pred_check
      _
    $region15: #{tpu_custom_call.1} parent=1 // pred_check_branch
      %227 = sbr.rel (0) target = $region17
    $region16: #{tpu_custom_call.1} parent=1 // pred_region
      %229 = dma.done [#allocation4], 16
    $region17: #{tpu_custom_call.1} parent=1 // pred_fallthru
      _
    %230 = vsyncpa [#allocation3], 1
    %231 = vsyncpa [#allocation4], 1

</llo_original>
